<compile_context>
chip_gen: v6e
topology: v6e:2x2x1
jax: 0.10.0
libtpu: 0.0.40
codegen_flags: <defaults>
</compile_context>

<pallas_src>
import functools

import jax
import jax.numpy as jnp
from jax.experimental import pallas as pl
from jax.experimental.pallas import tpu as pltpu

BN_EPS = 1e-5
_LANE = 128
_HIGH = jax.lax.Precision.HIGHEST


def _round_up(n, m):
    return -(-n // m) * m


# ----------------------------------------------------------------------------
# Kernels
# ----------------------------------------------------------------------------
def _layer1_fma(x, vecs_ref, state_size):
    """Conv1d(state_size, 256, 1) as state_size broadcast-FMAs on the VPU.

    Avoids padding x's tiny feature axis (K=4) to an MXU contraction.  w1's
    rows live in vecs_ref[0:state_size, :].
    """
    h = x[:, 0:1] * vecs_ref[0:1, :]
    for k in range(1, state_size):
        h = h + x[:, k:k + 1] * vecs_ref[k:k + 1, :]
    return h                                               # (rows, 256) f32


def _encoder_resident_kernel(x_ref, w23_ref, vecs_ref, o_ref, *, state_size):
    """Small-B path: whole batch resident in VMEM, BN stats computed in-kernel.

    vecs_ref (f32, (state_size+5, 256)) rows:
      [0:ss] w1 | [ss] gamma1 | [ss+1] beta1 | [ss+2] gamma2|0 |
      [ss+3] beta2|0 | [ss+4] b3 padded to 128 lanes | 0
    w23_ref (bf16, (384, 128)): rows 0:256 = w2, rows 256:384 = padded w3.
    """
    ss = state_size
    x = x_ref[...]                                         # (B, ss) f32
    inv_b = 1.0 / x.shape[0]

    # ---- Conv1d(ss, 256, 1)
    h = _layer1_fma(x, vecs_ref, ss)

    # ---- BatchNorm1d(256): centered variance (no cancellation / NaN risk)
    m = jnp.sum(h, axis=0, keepdims=True) * inv_b
    d = h - m
    v = jnp.sum(d * d, axis=0, keepdims=True) * inv_b
    h = d * (vecs_ref[ss:ss + 1, :] * jax.lax.rsqrt(v + BN_EPS)) \
        + vecs_ref[ss + 1:ss + 2, :]

    # ---- Conv1d(256, 128, 1): bf16 MXU operands, f32 accumulation
    h = jnp.dot(h.astype(jnp.bfloat16), w23_ref[0:256, :],
                preferred_element_type=jnp.float32)        # (B, 128)

    # ---- BatchNorm1d(128)
    m = jnp.sum(h, axis=0, keepdims=True) * inv_b
    d = h - m
    v = jnp.sum(d * d, axis=0, keepdims=True) * inv_b
    h = d * (vecs_ref[ss + 2:ss + 3, :_LANE] * jax.lax.rsqrt(v + BN_EPS)) \
        + vecs_ref[ss + 3:ss + 4, :_LANE]

    # ---- Conv1d(128, num_classes, 1); 128-lane slab => unmasked vst (small B)
    o_ref[...] = (jnp.dot(h.astype(jnp.bfloat16), w23_ref[256:384, :],
                          preferred_element_type=jnp.float32)
                  + vecs_ref[ss + 4:ss + 5, :_LANE]).astype(o_ref.dtype)


def _encoder_apply_kernel(x_ref, w23_ref, vecs_ref, o_ref, *, state_size, ncp):
    """Large-B path: purely per-row apply pass.  BN scale/shift precomputed in
    the wrapper from batch moments of x, so the B grid axis is "parallel".

    vecs_ref rows: [0:ss] w1 | [ss] scale1 | [ss+1] shift1 |
                   [ss+2] scale2|0 | [ss+3] shift2|0 | [ss+4] b3 padded|0.
    """
    ss = state_size
    x = x_ref[...]                                         # (TB, ss) f32

    h = _layer1_fma(x, vecs_ref, ss)                       # (TB, 256)
    h = h * vecs_ref[ss:ss + 1, :] + vecs_ref[ss + 1:ss + 2, :]

    h = jnp.dot(h.astype(jnp.bfloat16), w23_ref[0:256, :],
                preferred_element_type=jnp.float32)        # (TB, 128)
    h = h * vecs_ref[ss + 2:ss + 3, :_LANE] + vecs_ref[ss + 3:ss + 4, :_LANE]

    y = jnp.dot(h.astype(jnp.bfloat16), w23_ref[256:384, :],
                preferred_element_type=jnp.float32) \
        + vecs_ref[ss + 4:ss + 5, :_LANE]                  # (TB, 128)
    # Narrow writeback: masked vst, but ~16x less HBM write traffic at large B.
    o_ref[...] = y[:, :ncp].astype(o_ref.dtype)


# ----------------------------------------------------------------------------
# Wrappers
# ----------------------------------------------------------------------------
def _forward_resident(x, p):
    B, ss = x.shape
    w23, vecs = p["w23"], p["vecs_res"]
    full = lambda shape: pl.BlockSpec(shape, lambda: (0,) * len(shape))
    out = pl.pallas_call(
        functools.partial(_encoder_resident_kernel, state_size=ss),
        out_shape=jax.ShapeDtypeStruct((B, _LANE), jnp.float32),
        grid=(),
        in_specs=[full(x.shape), full(w23.shape), full(vecs.shape)],
        out_specs=full((B, _LANE)),
        compiler_params=pltpu.CompilerParams(vmem_limit_bytes=32 << 20),
    )(x.astype(jnp.float32), w23, vecs)
    return out[:, :p["num_classes"]]


def _batch_bn_fold(x, p):
    """Training-mode BN scale/shift for both BN layers, derived exactly from
    the tiny batch moments mean(x) and Cov(x) (everything before each BN is
    affine in x).  All dots are tiny and run at HIGHEST (f32) precision."""
    ss, nc = p["state_size"], p["num_classes"]
    w1 = p["w1"]                                    # (ss, 256) f32
    w2 = p["w23"][0:256, :].astype(jnp.float32)     # same weights the kernel uses
    g1, be1, g2, be2 = p["g1"], p["be1"], p["g2"], p["be2"]

    xf = x.astype(jnp.float32)
    mx = jnp.mean(xf, axis=0)                       # (ss,)
    xc = xf - mx
    cxx = jnp.dot(xc.T, xc, precision=_HIGH) / x.shape[0]   # (ss, ss) centered

    # BN1 stats of h1 = x @ w1 (conv bias cancels inside BN)
    m1 = jnp.dot(mx, w1, precision=_HIGH)
    v1 = jnp.sum(jnp.dot(cxx, w1, precision=_HIGH) * w1, axis=0)
    scale1 = g1 * jax.lax.rsqrt(jnp.maximum(v1, 0.0) + BN_EPS)
    shift1 = be1 - m1 * scale1

    # BN2 stats of h2 = (h1*scale1 + shift1) @ w2 = x @ A + c2
    a = jnp.dot(w1 * scale1[None, :], w2, precision=_HIGH)   # (ss, 128)
    m2 = jnp.dot(m1 * scale1 + shift1, w2, precision=_HIGH)  # (128,)
    v2 = jnp.sum(jnp.dot(cxx, a, precision=_HIGH) * a, axis=0)
    scale2 = g2 * jax.lax.rsqrt(jnp.maximum(v2, 0.0) + BN_EPS)
    shift2 = be2 - m2 * scale2

    vecs = jnp.zeros((ss + 5, 256), jnp.float32)
    vecs = vecs.at[:ss, :].set(w1)
    vecs = vecs.at[ss, :].set(scale1).at[ss + 1, :].set(shift1)
    vecs = vecs.at[ss + 2, :_LANE].set(scale2).at[ss + 3, :_LANE].set(shift2)
    vecs = vecs.at[ss + 4, :nc].set(p["b3"])
    return vecs


def _forward_tiled(x, p, tile_b):
    B, ss = x.shape
    nc = p["num_classes"]
    ncp = max(8, _round_up(nc, 8))          # narrow f32 output slab
    w23 = p["w23"]
    vecs = _batch_bn_fold(x, p)             # stats from unpadded x

    tb = min(tile_b, _round_up(B, 8))
    bp = _round_up(B, tb)
    xf = x.astype(jnp.float32)
    if bp != B:
        xf = jnp.zeros((bp, ss), jnp.float32).at[:B, :].set(xf)

    out = pl.pallas_call(
        functools.partial(_encoder_apply_kernel, state_size=ss, ncp=ncp),
        out_shape=jax.ShapeDtypeStruct((bp, ncp), jnp.float32),
        grid=(bp // tb,),
        in_specs=[pl.BlockSpec((tb, ss), lambda i: (i, 0)),
                  pl.BlockSpec(w23.shape, lambda i: (0, 0)),
                  pl.BlockSpec(vecs.shape, lambda i: (0, 0))],
        out_specs=pl.BlockSpec((tb, ncp), lambda i: (i, 0)),
        compiler_params=pltpu.CompilerParams(
            dimension_semantics=("parallel",),
            vmem_limit_bytes=32 << 20),
    )(xf, w23, vecs)
    return out[:B, :nc]


def encoder_forward(x, params, *, tile_b=1024, force_tiled=False):
    """x: (B, state_size) -> (B, num_classes) float32 (training-mode BN)."""
    B = x.shape[0]
    if B < 2:
        raise ValueError("BatchNorm1d in training mode requires batch > 1 "
                         "(PyTorch raises for B=1).")
    if force_tiled or B > tile_b:
        return _forward_tiled(x, params, tile_b)
    return _forward_resident(x, params)


# ----------------------------------------------------------------------------
# Parameters & reference
# ----------------------------------------------------------------------------
def init_params(key, state_size, num_classes):
    """PyTorch-matching init, in packed kernel form + plain reference form."""
    assert num_classes <= _LANE, "output packing assumes num_classes <= 128"
    k1, k2, k3, k4, k5, k6 = jax.random.split(key, 6)

    def conv_init(kw, kb, c_in, c_out):
        bound = 1.0 / float(c_in) ** 0.5
        w = jax.random.uniform(kw, (c_in, c_out), jnp.float32, -bound, bound)
        b = jax.random.uniform(kb, (c_out,), jnp.float32, -bound, bound)
        return w, b

    w1, b1 = conv_init(k1, k2, state_size, 256)
    w2, b2 = conv_init(k3, k4, 256, 128)
    w3, b3 = conv_init(k5, k6, 128, num_classes)
    g1, be1 = jnp.ones((256,), jnp.float32), jnp.zeros((256,), jnp.float32)
    g2, be2 = jnp.ones((128,), jnp.float32), jnp.zeros((128,), jnp.float32)

    # Packed kernel-side parameters: w2|w3 in one bf16 array, w1 rows + all
    # per-channel rows in one f32 array.  b1/b2 are dropped (BN cancels them).
    w3p = jnp.zeros((128, _LANE), jnp.bfloat16).at[:, :num_classes].set(
        w3.astype(jnp.bfloat16))
    w23 = jnp.concatenate([w2.astype(jnp.bfloat16), w3p], axis=0)   # (384,128)

    ss = state_size
    vecs_res = jnp.zeros((ss + 5, 256), jnp.float32)
    vecs_res = vecs_res.at[:ss, :].set(w1)
    vecs_res = vecs_res.at[ss, :].set(g1).at[ss + 1, :].set(be1)
    vecs_res = vecs_res.at[ss + 2, :_LANE].set(g2).at[ss + 3, :_LANE].set(be2)
    vecs_res = vecs_res.at[ss + 4, :num_classes].set(b3)

    kernel_params = dict(state_size=ss, num_classes=num_classes,
                         w1=w1, w23=w23, vecs_res=vecs_res,
                         g1=g1, be1=be1, g2=g2, be2=be2, b3=b3)
    ref_params = (w1, b1, g1, be1, w2, b2, g2, be2, w3, b3)
    return kernel_params, ref_params


def reference_forward(x, ref_params):
    """Pure-JAX f32 reference mirroring PyTorch training-mode forward
    (includes conv biases b1/b2 that the kernels drop)."""
    w1, b1, g1, be1, w2, b2, g2, be2, w3, b3 = ref_params
    dot = functools.partial(jnp.dot, precision=_HIGH)

    def bn(h, g, be):
        m = jnp.mean(h, axis=0, keepdims=True)
        v = jnp.mean((h - m) ** 2, axis=0, keepdims=True)
        return g * (h - m) / jnp.sqrt(v + BN_EPS) + be

    h = bn(dot(x, w1) + b1, g1, be1)
    h = bn(dot(h, w2) + b2, g2, be2)
    return dot(h, w3) + b3


if __name__ == "__main__":
    key = jax.random.PRNGKey(0)
    kx, kx2, kparams = jax.random.split(key, 3)

    batch = 8          # B=1 training-mode BN is an error in PyTorch
    state_size = 4     # Open / High / Low / Close
    num_classes = 3    # Buy / Sell / Idle

    kernel_params, ref_params = init_params(kparams, state_size, num_classes)

    # --- small-B resident path ----------------------------------------------
    x = jax.random.normal(kx, (batch, state_size), jnp.float32)
    out = jax.block_until_ready(encoder_forward(x, kernel_params))
    ref = reference_forward(x, ref_params)
    assert out.shape == (batch, num_classes), out.shape
    assert jnp.allclose(out, ref, atol=5e-2, rtol=5e-2), \
        f"resident max err {jnp.max(jnp.abs(out - ref))}"

    # --- larger-B tiled "parallel" path (BN stats folded in the wrapper) -----
    big_batch = 240
    x_big = jax.random.normal(kx2, (big_batch, state_size), jnp.float32)
    out_big = jax.block_until_ready(
        encoder_forward(x_big, kernel_params, tile_b=128, force_tiled=True))
    ref_big = reference_forward(x_big, ref_params)
    assert out_big.shape == (big_batch, num_classes), out_big.shape
    assert jnp.allclose(out_big, ref_big, atol=1e-1, rtol=1e-1), \
        f"tiled max err {jnp.max(jnp.abs(out_big - ref_big))}"

    print("KERNEL_OK")
</pallas_src>

<mosaic_0001>
module attributes {stable_mosaic.version = 11 : i64} {
  func.func @_encoder_resident_kernel(%arg0: memref<8x4xf32, #tpu.memory_space<vmem>>, %arg1: memref<384x128xbf16, #tpu.memory_space<vmem>>, %arg2: memref<9x256xf32, #tpu.memory_space<vmem>>, %arg3: memref<8x128xf32, #tpu.memory_space<vmem>>) attributes {dimension_semantics = [], scalar_prefetch = 0 : i64, scratch_operands = 0 : i64, tpu.core_type = #tpu.core_type<tc>} {
    %c0 = arith.constant 0 : index
    %c0_0 = arith.constant 0 : index
    %0 = vector.load %arg0[%c0, %c0_0] : memref<8x4xf32, #tpu.memory_space<vmem>>, vector<8x4xf32>
    %1 = vector.extract_strided_slice %0 {offsets = [0, 0], sizes = [8, 1], strides = [1, 1]} : vector<8x4xf32> to vector<8x1xf32>
    %c0_1 = arith.constant 0 : index
    %c0_2 = arith.constant 0 : index
    %2 = vector.load %arg2[%c0_1, %c0_2] : memref<9x256xf32, #tpu.memory_space<vmem>>, vector<1x256xf32>
    %3 = vector.broadcast %1 : vector<8x1xf32> to vector<8x256xf32>
    %4 = vector.broadcast %2 : vector<1x256xf32> to vector<8x256xf32>
    %5 = arith.mulf %3, %4 : vector<8x256xf32>
    %6 = vector.extract_strided_slice %0 {offsets = [0, 1], sizes = [8, 1], strides = [1, 1]} : vector<8x4xf32> to vector<8x1xf32>
    %c1 = arith.constant 1 : index
    %c0_3 = arith.constant 0 : index
    %7 = vector.load %arg2[%c1, %c0_3] : memref<9x256xf32, #tpu.memory_space<vmem>>, vector<1x256xf32>
    %8 = vector.broadcast %6 : vector<8x1xf32> to vector<8x256xf32>
    %9 = vector.broadcast %7 : vector<1x256xf32> to vector<8x256xf32>
    %10 = arith.mulf %8, %9 : vector<8x256xf32>
    %11 = arith.addf %5, %10 : vector<8x256xf32>
    %12 = vector.extract_strided_slice %0 {offsets = [0, 2], sizes = [8, 1], strides = [1, 1]} : vector<8x4xf32> to vector<8x1xf32>
    %c2 = arith.constant 2 : index
    %c0_4 = arith.constant 0 : index
    %13 = vector.load %arg2[%c2, %c0_4] : memref<9x256xf32, #tpu.memory_space<vmem>>, vector<1x256xf32>
    %14 = vector.broadcast %12 : vector<8x1xf32> to vector<8x256xf32>
    %15 = vector.broadcast %13 : vector<1x256xf32> to vector<8x256xf32>
    %16 = arith.mulf %14, %15 : vector<8x256xf32>
    %17 = arith.addf %11, %16 : vector<8x256xf32>
    %18 = vector.extract_strided_slice %0 {offsets = [0, 3], sizes = [8, 1], strides = [1, 1]} : vector<8x4xf32> to vector<8x1xf32>
    %c3 = arith.constant 3 : index
    %c0_5 = arith.constant 0 : index
    %19 = vector.load %arg2[%c3, %c0_5] : memref<9x256xf32, #tpu.memory_space<vmem>>, vector<1x256xf32>
    %20 = vector.broadcast %18 : vector<8x1xf32> to vector<8x256xf32>
    %21 = vector.broadcast %19 : vector<1x256xf32> to vector<8x256xf32>
    %22 = arith.mulf %20, %21 : vector<8x256xf32>
    %23 = arith.addf %17, %22 : vector<8x256xf32>
    %cst = arith.constant dense<0.000000e+00> : vector<256xf32>
    %24 = vector.multi_reduction <add>, %23, %cst [0] : vector<8x256xf32> to vector<256xf32>
    %25 = vector.shape_cast %24 : vector<256xf32> to vector<1x256xf32>
    %cst_6 = arith.constant 1.250000e-01 : f32
    %26 = vector.broadcast %cst_6 : f32 to vector<1x256xf32>
    %27 = arith.mulf %25, %26 : vector<1x256xf32>
    %28 = vector.broadcast %27 : vector<1x256xf32> to vector<8x256xf32>
    %29 = arith.subf %23, %28 : vector<8x256xf32>
    %30 = arith.mulf %29, %29 : vector<8x256xf32>
    %cst_7 = arith.constant dense<0.000000e+00> : vector<256xf32>
    %31 = vector.multi_reduction <add>, %30, %cst_7 [0] : vector<8x256xf32> to vector<256xf32>
    %32 = vector.shape_cast %31 : vector<256xf32> to vector<1x256xf32>
    %cst_8 = arith.constant 1.250000e-01 : f32
    %33 = vector.broadcast %cst_8 : f32 to vector<1x256xf32>
    %34 = arith.mulf %32, %33 : vector<1x256xf32>
    %c4 = arith.constant 4 : index
    %c0_9 = arith.constant 0 : index
    %35 = vector.load %arg2[%c4, %c0_9] : memref<9x256xf32, #tpu.memory_space<vmem>>, vector<1x256xf32>
    %cst_10 = arith.constant 9.99999974E-6 : f32
    %36 = vector.broadcast %cst_10 : f32 to vector<1x256xf32>
    %37 = arith.addf %34, %36 : vector<1x256xf32>
    %38 = math.rsqrt %37 : vector<1x256xf32>
    %39 = arith.mulf %35, %38 : vector<1x256xf32>
    %40 = vector.broadcast %39 : vector<1x256xf32> to vector<8x256xf32>
    %41 = arith.mulf %29, %40 : vector<8x256xf32>
    %c5 = arith.constant 5 : index
    %c0_11 = arith.constant 0 : index
    %42 = vector.load %arg2[%c5, %c0_11] : memref<9x256xf32, #tpu.memory_space<vmem>>, vector<1x256xf32>
    %43 = vector.broadcast %42 : vector<1x256xf32> to vector<8x256xf32>
    %44 = arith.addf %41, %43 : vector<8x256xf32>
    %45 = arith.truncf %44 : vector<8x256xf32> to vector<8x256xbf16>
    %c0_12 = arith.constant 0 : index
    %c0_13 = arith.constant 0 : index
    %46 = vector.load %arg1[%c0_12, %c0_13] : memref<384x128xbf16, #tpu.memory_space<vmem>>, vector<256x128xbf16>
    %cst_14 = arith.constant dense<0.000000e+00> : vector<8x128xf32>
    %47 = tpu.matmul %45, %46, %cst_14 {dimension_numbers = #tpu.dot_dimension_numbers<[1], [0], [0], [1], [0, 0, 1, 1], [], []>} : vector<8x256xbf16>, vector<256x128xbf16>, vector<8x128xf32> -> vector<8x128xf32>
    %cst_15 = arith.constant dense<0.000000e+00> : vector<128xf32>
    %48 = vector.multi_reduction <add>, %47, %cst_15 [0] : vector<8x128xf32> to vector<128xf32>
    %49 = vector.shape_cast %48 : vector<128xf32> to vector<1x128xf32>
    %cst_16 = arith.constant 1.250000e-01 : f32
    %50 = vector.broadcast %cst_16 : f32 to vector<1x128xf32>
    %51 = arith.mulf %49, %50 : vector<1x128xf32>
    %52 = vector.broadcast %51 : vector<1x128xf32> to vector<8x128xf32>
    %53 = arith.subf %47, %52 : vector<8x128xf32>
    %54 = arith.mulf %53, %53 : vector<8x128xf32>
    %cst_17 = arith.constant dense<0.000000e+00> : vector<128xf32>
    %55 = vector.multi_reduction <add>, %54, %cst_17 [0] : vector<8x128xf32> to vector<128xf32>
    %56 = vector.shape_cast %55 : vector<128xf32> to vector<1x128xf32>
    %cst_18 = arith.constant 1.250000e-01 : f32
    %57 = vector.broadcast %cst_18 : f32 to vector<1x128xf32>
    %58 = arith.mulf %56, %57 : vector<1x128xf32>
    %c6 = arith.constant 6 : index
    %c0_19 = arith.constant 0 : index
    %59 = vector.load %arg2[%c6, %c0_19] : memref<9x256xf32, #tpu.memory_space<vmem>>, vector<1x128xf32>
    %cst_20 = arith.constant 9.99999974E-6 : f32
    %60 = vector.broadcast %cst_20 : f32 to vector<1x128xf32>
    %61 = arith.addf %58, %60 : vector<1x128xf32>
    %62 = math.rsqrt %61 : vector<1x128xf32>
    %63 = arith.mulf %59, %62 : vector<1x128xf32>
    %64 = vector.broadcast %63 : vector<1x128xf32> to vector<8x128xf32>
    %65 = arith.mulf %53, %64 : vector<8x128xf32>
    %c7 = arith.constant 7 : index
    %c0_21 = arith.constant 0 : index
    %66 = vector.load %arg2[%c7, %c0_21] : memref<9x256xf32, #tpu.memory_space<vmem>>, vector<1x128xf32>
    %67 = vector.broadcast %66 : vector<1x128xf32> to vector<8x128xf32>
    %68 = arith.addf %65, %67 : vector<8x128xf32>
    %69 = arith.truncf %68 : vector<8x128xf32> to vector<8x128xbf16>
    %c256 = arith.constant 256 : index
    %c0_22 = arith.constant 0 : index
    %70 = vector.load %arg1[%c256, %c0_22] : memref<384x128xbf16, #tpu.memory_space<vmem>>, vector<128x128xbf16>
    %cst_23 = arith.constant dense<0.000000e+00> : vector<8x128xf32>
    %71 = tpu.matmul %69, %70, %cst_23 {dimension_numbers = #tpu.dot_dimension_numbers<[1], [0], [0], [1], [0, 0, 1, 1], [], []>} : vector<8x128xbf16>, vector<128x128xbf16>, vector<8x128xf32> -> vector<8x128xf32>
    %c8 = arith.constant 8 : index
    %c0_24 = arith.constant 0 : index
    %72 = vector.load %arg2[%c8, %c0_24] : memref<9x256xf32, #tpu.memory_space<vmem>>, vector<1x128xf32>
    %73 = vector.broadcast %72 : vector<1x128xf32> to vector<8x128xf32>
    %74 = arith.addf %71, %73 : vector<8x128xf32>
    %c0_25 = arith.constant 0 : index
    %c0_26 = arith.constant 0 : index
    %75 = vector.load %arg3[%c0_25, %c0_26] : memref<8x128xf32, #tpu.memory_space<vmem>>, vector<8x128xf32>
    tpu.vector_store %arg3[%c0_25, %c0_26], %74 {strides = array<i32>} : memref<8x128xf32, #tpu.memory_space<vmem>>, vector<8x128xf32>,
    return
  }
}

</mosaic_0001>

<llo_original>
// kernel: tpu_custom_call.1
$region0: #{tpu_custom_call.1}
  #allocation0 [shape = 'u32[]', space=smem, size = 0x4, offset = 0x4, fixed_abs, tag = 'smem constant byte address 0x4 - core index']
  #allocation1 [shape = 'u32[144,128]{1,0:T(1,128)}', space=vmem, size = 0x12000, scoped, tag = 'internal scratch']
  %s0 = inlined_call_operand.vmem [shape: f32[8,4], index: 0, kind: input, shape index: {}]
  %s1 = inlined_call_operand.hbm [shape: bf16[384,128], index: 1, kind: input, shape index: {}]
  %s2 = inlined_call_operand.hbm [shape: f32[9,256], index: 2, kind: input, shape index: {}]
  %s3 = inlined_call_operand.hbm [shape: f32[8,128], index: 3, kind: output, shape index: {}]
  %s4 = sld [smem:[#allocation0]]
  $region30: #{tpu_custom_call.1} parent=0
    _
  %s6 = ssub.s32 1, %s4
  %s7 = scalar_select 0, %s6, %s4
  $region1: #{tpu_custom_call.1} parent=0
    #allocation2 [shape = 'u8[98304]{0}', space=vmem, size = 0x18000, scoped, tag = 'input window, operand 1, single buffered']
    #allocation3 [shape = 's32[1]{0}', space=sflag, size = 0x4, scoped, tag = 'scoped memory for tpu_custom_call.1']
    #allocation4 [shape = 's32[1]{0}', space=sflag, size = 0x4, scoped, tag = 'scoped memory for tpu_custom_call.1']
    #allocation5 [shape = 'u8[16384]{0}', space=vmem, size = 0x4000, scoped, tag = 'input window, operand 2, single buffered']
    #allocation6 [shape = 's32[1]{0}', space=sflag, size = 0x4, scoped, tag = 'scoped memory for tpu_custom_call.1']
    #allocation7 [shape = 'u8[4096]{0}', space=vmem, size = 0x1000, scoped, tag = 'output window, operand 0, single buffered']
    %8 = vsyncpa [#allocation3], 0
    %9 = vsyncpa [#allocation6], 0
    %10 = vsyncpa [#allocation4], 0
    // Predicated region
    $region2: #{tpu_custom_call.1} parent=1 // pred_check
      _
    $region3: #{tpu_custom_call.1} parent=1 // pred_check_branch
      %12 = sbr.rel (0) target = $region5
    $region4: #{tpu_custom_call.1} parent=1 // pred_region
      _
    $region5: #{tpu_custom_call.1} parent=1 // pred_fallthru
      _
    // Predicated region
    $region6: #{tpu_custom_call.1} parent=1 // pred_check
      _
    $region7: #{tpu_custom_call.1} parent=1 // pred_check_branch
      %14 = sbr.rel (0) target = $region9
    $region8: #{tpu_custom_call.1} parent=1 // pred_region
      %s16 = ssub.s32 3072, 3072
      %17 = vsyncadd [#allocation3], %s16
      %s18 = sshll.u32 [#allocation2], 4
      %s19 = int_to_ptr.vmem [resolvable:$true] %s18
      %24 = dma.hbm_to_vmem [thread:$0]  %s1, 3072, %s19, [#allocation3], 64, 64, 4
    $region9: #{tpu_custom_call.1} parent=1 // pred_fallthru
      _
    // Predicated region
    $region10: #{tpu_custom_call.1} parent=1 // pred_check
      _
    $region11: #{tpu_custom_call.1} parent=1 // pred_check_branch
      %26 = sbr.rel (0) target = $region13
    $region12: #{tpu_custom_call.1} parent=1 // pred_region
      %s28 = ssub.s32 512, 512
      %29 = vsyncadd [#allocation6], %s28
      %s30 = sshll.u32 [#allocation5], 4
      %s31 = int_to_ptr.vmem [resolvable:$true] %s30
      %36 = dma.hbm_to_vmem [thread:$0]  %s2, 512, %s31, [#allocation6], 256, 256, 16
    $region13: #{tpu_custom_call.1} parent=1 // pred_fallthru
      _
    // Predicated region
    $region14: #{tpu_custom_call.1} parent=1 // pred_check
      _
    $region15: #{tpu_custom_call.1} parent=1 // pred_check_branch
      %38 = sbr.rel (0) target = $region17
    $region16: #{tpu_custom_call.1} parent=1 // pred_region
      %39 = dma.done [#allocation3], 3072
    $region17: #{tpu_custom_call.1} parent=1 // pred_fallthru
      _
    // Predicated region
    $region18: #{tpu_custom_call.1} parent=1 // pred_check
      _
    $region19: #{tpu_custom_call.1} parent=1 // pred_check_branch
      %41 = sbr.rel (0) target = $region21
    $region20: #{tpu_custom_call.1} parent=1 // pred_region
      %42 = dma.done [#allocation6], 512
    $region21: #{tpu_custom_call.1} parent=1 // pred_fallthru
      _
    %v44 = vld [vmem:[%s0] sm:$0xff]
    %v45 = vld [vmem:[#allocation5] ss:$8 sm:$0x3]
    %47 = vset.pattern.permute.xlu0 0
    %48 = vperm.xlu0 %47, %v44
    %v49 = vpop.permute.xlu0 %48
    %v52 = vlaneseq
    %v53 = vshrl.u32 %v52, 7
    %v54 = vsub.s32 0, %v53
    %v55 = vrot.slane %v45, %v54
    %v56 = vlaneseq
    %v57 = vshrl.u32 %v56, 7
    %v58 = vsub.s32 1, %v57
    %v59 = vrot.slane %v45, %v58
    %v62 = vmul.f32 %v49, %v55
    %v63 = vmul.f32 %v49, %v59
    %s64 = scalar_lea.vmem [#allocation5], 1
    %v65 = vld [vmem:[%s64] ss:$8 sm:$0x3]
    %66 = vset.pattern.permute.xlu0 1
    %67 = vperm.xlu0 %66, %v44
    %v68 = vpop.permute.xlu0 %67
    %v71 = vlaneseq
    %v72 = vshrl.u32 %v71, 7
    %v73 = vsub.s32 0, %v72
    %v74 = vrot.slane %v65, %v73
    %v75 = vlaneseq
    %v76 = vshrl.u32 %v75, 7
    %v77 = vsub.s32 1, %v76
    %v78 = vrot.slane %v65, %v77
    %v81 = vmul.f32 %v68, %v74
    %v82 = vmul.f32 %v68, %v78
    %v83 = vadd.f32 %v62, %v81
    %v84 = vadd.f32 %v63, %v82
    %s85 = scalar_lea.vmem [#allocation5], 2
    %v86 = vld [vmem:[%s85] ss:$8 sm:$0x3]
    %87 = vset.pattern.permute.xlu0 2
    %88 = vperm.xlu0 %87, %v44
    %v89 = vpop.permute.xlu0 %88
    %v92 = vlaneseq
    %v93 = vshrl.u32 %v92, 7
    %v94 = vsub.s32 0, %v93
    %v95 = vrot.slane %v86, %v94
    %v96 = vlaneseq
    %v97 = vshrl.u32 %v96, 7
    %v98 = vsub.s32 1, %v97
    %v99 = vrot.slane %v86, %v98
    %v102 = vmul.f32 %v89, %v95
    %v103 = vmul.f32 %v89, %v99
    %v104 = vadd.f32 %v83, %v102
    %v105 = vadd.f32 %v84, %v103
    %s106 = scalar_lea.vmem [#allocation5], 3
    %v107 = vld [vmem:[%s106] ss:$8 sm:$0x3]
    %108 = vset.pattern.permute.xlu0 3
    %109 = vperm.xlu0 %108, %v44
    %v110 = vpop.permute.xlu0 %109
    %v113 = vlaneseq
    %v114 = vshrl.u32 %v113, 7
    %v115 = vsub.s32 0, %v114
    %v116 = vrot.slane %v107, %v115
    %v117 = vlaneseq
    %v118 = vshrl.u32 %v117, 7
    %v119 = vsub.s32 1, %v118
    %v120 = vrot.slane %v107, %v119
    %v123 = vmul.f32 %v110, %v116
    %v124 = vmul.f32 %v110, %v120
    %v125 = vadd.f32 %v104, %v123
    %v126 = vadd.f32 %v105, %v124
    %v127 = vrot.slane %v125, 4
    %v128 = vadd.f32 %v125, %v127
    %v129 = vrot.slane %v128, 2
    %v130 = vadd.f32 %v128, %v129
    %v131 = vrot.slane %v130, 1
    %v132 = vadd.f32 %v130, %v131
    %v133 = vrot.slane %v126, 4
    %v134 = vadd.f32 %v126, %v133
    %v135 = vrot.slane %v134, 2
    %v136 = vadd.f32 %v134, %v135
    %v137 = vrot.slane %v136, 1
    %v138 = vadd.f32 %v136, %v137
    %v139 = vmul.f32 %v132, 0.125
    %v140 = vmul.f32 %v138, 0.125
    %v141 = vsub.f32 %v125, %v139
    %v142 = vsub.f32 %v126, %v140
    %v143 = vmul.f32 %v141, %v141
    %v144 = vmul.f32 %v142, %v142
    %v145 = vrot.slane %v143, 4
    %v146 = vadd.f32 %v143, %v145
    %v147 = vrot.slane %v146, 2
    %v148 = vadd.f32 %v146, %v147
    %v149 = vrot.slane %v148, 1
    %v150 = vadd.f32 %v148, %v149
    %v151 = vrot.slane %v144, 4
    %v152 = vadd.f32 %v144, %v151
    %v153 = vrot.slane %v152, 2
    %v154 = vadd.f32 %v152, %v153
    %v155 = vrot.slane %v154, 1
    %v156 = vadd.f32 %v154, %v155
    %v157 = vmul.f32 %v150, 0.125
    %v158 = vmul.f32 %v156, 0.125
    %s159 = scalar_lea.vmem [#allocation5], 4
    %v160 = vld [vmem:[%s159] ss:$8 sm:$0x3]
    %v161 = vadd.f32 %v157, 1e-05
    %v162 = vadd.f32 %v158, 1e-05
    %v163 = vrsqrt.pop %v161
    %v164 = vrsqrt.pop %v162
    %v167 = vcombine.low %v163, %v164
    %v169 = vunpack.c.l.s4 1966171168
    %v170 = vunpack.c.0.s8 %v169
    %v171 = vlaneseq
    %v172 = vshrl.u32 %v171, 7
    %v173 = vsub.s32 %v170, %v172
    %v174 = vrot.slane %v167, %v173
    %v176 = vunpack.c.l.s4 1966171168
    %v177 = vunpack.c.0.s8 %v176
    %v178 = vlaneseq
    %v179 = vshrl.u32 %v178, 7
    %v180 = vsub.s32 %v177, %v179
    %v181 = vrot.slane %v174, %v180
    %v183 = vmul.f32 %v160, %v181
    %v185 = vlaneseq
    %v186 = vshrl.u32 %v185, 7
    %v187 = vsub.s32 0, %v186
    %v188 = vrot.slane %v183, %v187
    %v189 = vlaneseq
    %v190 = vshrl.u32 %v189, 7
    %v191 = vsub.s32 1, %v190
    %v192 = vrot.slane %v183, %v191
    %v195 = vmul.f32 %v141, %v188
    %v196 = vmul.f32 %v142, %v192
    %s197 = scalar_lea.vmem [#allocation5], 5
    %v198 = vld [vmem:[%s197] ss:$8 sm:$0x3]
    %v200 = vlaneseq
    %v201 = vshrl.u32 %v200, 7
    %v202 = vsub.s32 0, %v201
    %v203 = vrot.slane %v198, %v202
    %v204 = vlaneseq
    %v205 = vshrl.u32 %v204, 7
    %v206 = vsub.s32 1, %v205
    %v207 = vrot.slane %v198, %v206
    %v210 = vadd.f32 %v195, %v203
    %v211 = vadd.f32 %v196, %v207
    %v212 = vpack.c.bf16 %v210, %v210
    %v213 = vpack.c.bf16 %v211, %v211
    %v214 = vld [vmem:[#allocation2] sm:$0xf]
    %v215 = vld [vmem:[#allocation2 + $0x4] sm:$0xf]
    %v216 = vld [vmem:[#allocation2 + $0x8] sm:$0xf]
    %v217 = vld [vmem:[#allocation2 + $0xc] sm:$0xf]
    %v218 = vld [vmem:[#allocation2 + $0x10] sm:$0xf]
    %v219 = vld [vmem:[#allocation2 + $0x14] sm:$0xf]
    %v220 = vld [vmem:[#allocation2 + $0x18] sm:$0xf]
    %v221 = vld [vmem:[#allocation2 + $0x1c] sm:$0xf]
    %v222 = vld [vmem:[#allocation2 + $0x20] sm:$0xf]
    %v223 = vld [vmem:[#allocation2 + $0x24] sm:$0xf]
    %v224 = vld [vmem:[#allocation2 + $0x28] sm:$0xf]
    %v225 = vld [vmem:[#allocation2 + $0x2c] sm:$0xf]
    %v226 = vld [vmem:[#allocation2 + $0x30] sm:$0xf]
    %v227 = vld [vmem:[#allocation2 + $0x34] sm:$0xf]
    %v228 = vld [vmem:[#allocation2 + $0x38] sm:$0xf]
    %v229 = vld [vmem:[#allocation2 + $0x3c] sm:$0xf]
    %v230 = vld [vmem:[#allocation2 + $0x40] sm:$0xf]
    %v231 = vld [vmem:[#allocation2 + $0x44] sm:$0xf]
    %v232 = vld [vmem:[#allocation2 + $0x48] sm:$0xf]
    %v233 = vld [vmem:[#allocation2 + $0x4c] sm:$0xf]
    %v234 = vld [vmem:[#allocation2 + $0x50] sm:$0xf]
    %v235 = vld [vmem:[#allocation2 + $0x54] sm:$0xf]
    %v236 = vld [vmem:[#allocation2 + $0x58] sm:$0xf]
    %v237 = vld [vmem:[#allocation2 + $0x5c] sm:$0xf]
    %v238 = vld [vmem:[#allocation2 + $0x60] sm:$0xf]
    %v239 = vld [vmem:[#allocation2 + $0x64] sm:$0xf]
    %v240 = vld [vmem:[#allocation2 + $0x68] sm:$0xf]
    %v241 = vld [vmem:[#allocation2 + $0x6c] sm:$0xf]
    %v242 = vld [vmem:[#allocation2 + $0x70] sm:$0xf]
    %v243 = vld [vmem:[#allocation2 + $0x74] sm:$0xf]
    %v244 = vld [vmem:[#allocation2 + $0x78] sm:$0xf]
    %v245 = vld [vmem:[#allocation2 + $0x7c] sm:$0xf]
    %v278 = vunpack.c.l.b16 %v214
    %v279 = vunpack.c.l.b16 %v215
    %v280 = vunpack.c.l.b16 %v216
    %v281 = vunpack.c.l.b16 %v217
    %v282 = vunpack.c.l.b16 %v218
    %v283 = vunpack.c.l.b16 %v219
    %v284 = vunpack.c.l.b16 %v220
    %v285 = vunpack.c.l.b16 %v221
    %v286 = vunpack.c.l.b16 %v222
    %v287 = vunpack.c.l.b16 %v223
    %v288 = vunpack.c.l.b16 %v224
    %v289 = vunpack.c.l.b16 %v225
    %v290 = vunpack.c.l.b16 %v226
    %v291 = vunpack.c.l.b16 %v227
    %v292 = vunpack.c.l.b16 %v228
    %v293 = vunpack.c.l.b16 %v229
    %v294 = vunpack.c.l.b16 %v230
    %v295 = vunpack.c.l.b16 %v231
    %v296 = vunpack.c.l.b16 %v232
    %v297 = vunpack.c.l.b16 %v233
    %v298 = vunpack.c.l.b16 %v234
    %v299 = vunpack.c.l.b16 %v235
    %v300 = vunpack.c.l.b16 %v236
    %v301 = vunpack.c.l.b16 %v237
    %v302 = vunpack.c.l.b16 %v238
    %v303 = vunpack.c.l.b16 %v239
    %v304 = vunpack.c.l.b16 %v240
    %v305 = vunpack.c.l.b16 %v241
    %v306 = vunpack.c.l.b16 %v242
    %v307 = vunpack.c.l.b16 %v243
    %v308 = vunpack.c.l.b16 %v244
    %v309 = vunpack.c.l.b16 %v245
    %v310 = vpack.c.b16 %v279, %v278
    %v311 = vpack.c.b16 %v281, %v280
    %v312 = vpack.c.b16 %v283, %v282
    %v313 = vpack.c.b16 %v285, %v284
    %v314 = vpack.c.b16 %v287, %v286
    %v315 = vpack.c.b16 %v289, %v288
    %v316 = vpack.c.b16 %v291, %v290
    %v317 = vpack.c.b16 %v293, %v292
    %v318 = vpack.c.b16 %v295, %v294
    %v319 = vpack.c.b16 %v297, %v296
    %v320 = vpack.c.b16 %v299, %v298
    %v321 = vpack.c.b16 %v301, %v300
    %v322 = vpack.c.b16 %v303, %v302
    %v323 = vpack.c.b16 %v305, %v304
    %v324 = vpack.c.b16 %v307, %v306
    %v325 = vpack.c.b16 %v309, %v308
    %342 = vmatprep.subr.bf16.mxu0 0
    %343 = vmatpush1.bf16.msra.mxu0 %v317
    %344 = vmatprep.subr.bf16.mxu0 0
    %345 = vmatpush1.bf16.msra.mxu0 %v316
    %346 = vmatprep.subr.bf16.mxu0 0
    %347 = vmatpush1.bf16.msra.mxu0 %v315
    %348 = vmatprep.subr.bf16.mxu0 0
    %349 = vmatpush1.bf16.msra.mxu0 %v314
    %350 = vmatprep.subr.bf16.mxu0 0
    %351 = vmatpush1.bf16.msra.mxu0 %v313
    %352 = vmatprep.subr.bf16.mxu0 0
    %353 = vmatpush1.bf16.msra.mxu0 %v312
    %354 = vmatprep.subr.bf16.mxu0 0
    %355 = vmatpush1.bf16.msra.mxu0 %v311
    %356 = vmatprep.subr.bf16.mxu0 0
    %357 = vmatpush1.bf16.msra.mxu0 %v310
    %358 = vmatprep.subr.bf16.mxu0 0
    %359 = vmatpush2.bf16.msra.mxu0 %v325
    %360 = vmatprep.subr.bf16.mxu0 0
    %361 = vmatpush2.bf16.msra.mxu0 %v324
    %362 = vmatprep.subr.bf16.mxu0 0
    %363 = vmatpush2.bf16.msra.mxu0 %v323
    %364 = vmatprep.subr.bf16.mxu0 0
    %365 = vmatpush2.bf16.msra.mxu0 %v322
    %366 = vmatprep.subr.bf16.mxu0 0
    %367 = vmatpush2.bf16.msra.mxu0 %v321
    %368 = vmatprep.subr.bf16.mxu0 0
    %369 = vmatpush2.bf16.msra.mxu0 %v320
    %370 = vmatprep.subr.bf16.mxu0 0
    %371 = vmatpush2.bf16.msra.mxu0 %v319
    %372 = vmatprep.subr.bf16.mxu0 0
    %373 = vmatpush2.bf16.msra.mxu0 %v318
    %374 = vmatprep.mubr.bf16.mxu0 %v213
    %375 = vmatmul.mubr.bf16.gmra.mxu0 %v212
    %v376 = vpop.f32.mrf.mxu0
    %v377 = vadd.f32 0.0, %v376
    %v378 = vpop.f32.mrf.mxu0
    %v379 = vpop.f32.mrf.mxu0
    %v380 = vpop.f32.mrf.mxu0
    %381 = vdwg.mxu0
    %v382 = vrot.slane %v377, 4
    %v383 = vadd.f32 %v377, %v382
    %v384 = vrot.slane %v383, 2
    %v385 = vadd.f32 %v383, %v384
    %v386 = vrot.slane %v385, 1
    %v387 = vadd.f32 %v385, %v386
    %v388 = vmul.f32 %v387, 0.125
    %v389 = vsub.f32 %v377, %v388
    %v390 = vmul.f32 %v389, %v389
    %v391 = vrot.slane %v390, 4
    %v392 = vadd.f32 %v390, %v391
    %v393 = vrot.slane %v392, 2
    %v394 = vadd.f32 %v392, %v393
    %v395 = vrot.slane %v394, 1
    %v396 = vadd.f32 %v394, %v395
    %v397 = vmul.f32 %v396, 0.125
    %v398 = vld [vmem:[#allocation5 + $0x6] ss:$0 sm:$0xff]
    %v399 = vadd.f32 %v397, 1e-05
    %v400 = vrsqrt.pop %v399
    %v401 = vmul.f32 %v398, %v400
    %v402 = vmul.f32 %v389, %v401
    %v403 = vld [vmem:[#allocation5 + $0x7] ss:$0 sm:$0xff]
    %v404 = vadd.f32 %v402, %v403
    %v405 = vpack.c.bf16 %v404, %v404
    %v406 = vld [vmem:[#allocation2 + $0x80] sm:$0xf]
    %v407 = vld [vmem:[#allocation2 + $0x84] sm:$0xf]
    %v408 = vld [vmem:[#allocation2 + $0x88] sm:$0xf]
    %v409 = vld [vmem:[#allocation2 + $0x8c] sm:$0xf]
    %v410 = vld [vmem:[#allocation2 + $0x90] sm:$0xf]
    %v411 = vld [vmem:[#allocation2 + $0x94] sm:$0xf]
    %v412 = vld [vmem:[#allocation2 + $0x98] sm:$0xf]
    %v413 = vld [vmem:[#allocation2 + $0x9c] sm:$0xf]
    %v414 = vld [vmem:[#allocation2 + $0xa0] sm:$0xf]
    %v415 = vld [vmem:[#allocation2 + $0xa4] sm:$0xf]
    %v416 = vld [vmem:[#allocation2 + $0xa8] sm:$0xf]
    %v417 = vld [vmem:[#allocation2 + $0xac] sm:$0xf]
    %v418 = vld [vmem:[#allocation2 + $0xb0] sm:$0xf]
    %v419 = vld [vmem:[#allocation2 + $0xb4] sm:$0xf]
    %v420 = vld [vmem:[#allocation2 + $0xb8] sm:$0xf]
    %v421 = vld [vmem:[#allocation2 + $0xbc] sm:$0xf]
    %v422 = vld [vmem:[#allocation5 + $0x10] ss:$0 sm:$0xff]
    %v439 = vunpack.c.l.b16 %v406
    %v440 = vunpack.c.l.b16 %v407
    %v441 = vunpack.c.l.b16 %v408
    %v442 = vunpack.c.l.b16 %v409
    %v443 = vunpack.c.l.b16 %v410
    %v444 = vunpack.c.l.b16 %v411
    %v445 = vunpack.c.l.b16 %v412
    %v446 = vunpack.c.l.b16 %v413
    %v447 = vunpack.c.l.b16 %v414
    %v448 = vunpack.c.l.b16 %v415
    %v449 = vunpack.c.l.b16 %v416
    %v450 = vunpack.c.l.b16 %v417
    %v451 = vunpack.c.l.b16 %v418
    %v452 = vunpack.c.l.b16 %v419
    %v453 = vunpack.c.l.b16 %v420
    %v454 = vunpack.c.l.b16 %v421
    %v455 = vpack.c.b16 %v440, %v439
    %v456 = vpack.c.b16 %v442, %v441
    %v457 = vpack.c.b16 %v444, %v443
    %v458 = vpack.c.b16 %v446, %v445
    %v459 = vpack.c.b16 %v448, %v447
    %v460 = vpack.c.b16 %v450, %v449
    %v461 = vpack.c.b16 %v452, %v451
    %v462 = vpack.c.b16 %v454, %v453
    %471 = vmatprep.subr.bf16.mxu0 0
    %472 = vmatpush1.bf16.msra.mxu0 %v462
    %473 = vmatprep.subr.bf16.mxu0 0
    %474 = vmatpush1.bf16.msra.mxu0 %v461
    %475 = vmatprep.subr.bf16.mxu0 0
    %476 = vmatpush1.bf16.msra.mxu0 %v460
    %477 = vmatprep.subr.bf16.mxu0 0
    %478 = vmatpush1.bf16.msra.mxu0 %v459
    %479 = vmatprep.subr.bf16.mxu0 0
    %480 = vmatpush1.bf16.msra.mxu0 %v458
    %481 = vmatprep.subr.bf16.mxu0 0
    %482 = vmatpush1.bf16.msra.mxu0 %v457
    %483 = vmatprep.subr.bf16.mxu0 0
    %484 = vmatpush1.bf16.msra.mxu0 %v456
    %485 = vmatprep.subr.bf16.mxu0 0
    %486 = vmatpush1.bf16.msra.mxu0 %v455
    %487 = vmatprep.subr.bf16.mxu0 0
    %488 = vmatpush2.bf16.msra.mxu0 0
    %489 = vmatprep.subr.bf16.mxu0 0
    %490 = vmatpush2.bf16.msra.mxu0 0
    %491 = vmatprep.subr.bf16.mxu0 0
    %492 = vmatpush2.bf16.msra.mxu0 0
    %493 = vmatprep.subr.bf16.mxu0 0
    %494 = vmatpush2.bf16.msra.mxu0 0
    %495 = vmatprep.subr.bf16.mxu0 0
    %496 = vmatpush2.bf16.msra.mxu0 0
    %497 = vmatprep.subr.bf16.mxu0 0
    %498 = vmatpush2.bf16.msra.mxu0 0
    %499 = vmatprep.subr.bf16.mxu0 0
    %500 = vmatpush2.bf16.msra.mxu0 0
    %501 = vmatprep.subr.bf16.mxu0 0
    %502 = vmatpush2.bf16.msra.mxu0 0
    %503 = vmatprep.mubr.bf16.mxu0 0
    %504 = vmatmul.mubr.bf16.gmra.mxu0 %v405
    %v505 = vpop.f32.mrf.mxu0
    %v506 = vadd.f32 %v422, %v505
    %v507 = vpop.f32.mrf.mxu0
    %v508 = vpop.f32.mrf.mxu0
    %v509 = vpop.f32.mrf.mxu0
    %510 = vdwg.mxu0
    %511 = vst [vmem:[#allocation7] sm:$0xff] %v506
    // Predicated region
    $region22: #{tpu_custom_call.1} parent=1 // pred_check
      _
    $region23: #{tpu_custom_call.1} parent=1 // pred_check_branch
      %513 = sbr.rel (0) target = $region25
    $region24: #{tpu_custom_call.1} parent=1 // pred_region
      %s515 = ssub.s32 128, 128
      %516 = vsyncadd [#allocation4], %s515
      %s518 = sshll.u32 [#allocation7], 4
      %s519 = int_to_ptr.vmem [resolvable:$true] %s518
      %521 = dma.vmem_to_hbm [thread:$0]  %s519, 128, %s3, [#allocation4]
    $region25: #{tpu_custom_call.1} parent=1 // pred_fallthru
      _
    // Predicated region
    $region26: #{tpu_custom_call.1} parent=1 // pred_check
      _
    $region27: #{tpu_custom_call.1} parent=1 // pred_check_branch
      %523 = sbr.rel (0) target = $region29
    $region28: #{tpu_custom_call.1} parent=1 // pred_region
      %524 = dma.done [#allocation4], 128
    $region29: #{tpu_custom_call.1} parent=1 // pred_fallthru
      _
    %525 = vsyncpa [#allocation3], 1
    %526 = vsyncpa [#allocation6], 1
    %527 = vsyncpa [#allocation4], 1

</llo_original>
